<compile_context>
chip_gen: v7x
topology: tpu7x:2x2x1
jax: 0.10.0
libtpu: 0.0.40
codegen_flags: <defaults>
</compile_context>

<pallas_src>
import functools

import jax
import jax.numpy as jnp
from jax.experimental import pallas as pl
from jax.experimental.pallas import tpu as pltpu

_EPS = 1e-5
_ACT_VMEM_BUDGET = 10 * 1024 * 1024  # activation working set per grid step (all gens)


def _choose_tile(length, c_in, c_out, ksize, pad, max_tile_l=None):
    """Largest lane-dense (multiple-of-128) tile dividing `length`, at least 2*pad wide
    (so the causal halo fits in one neighbouring tile) and within the VMEM budget."""
    if length % 128 != 0:
        return length  # lane-misaligned fallback: one full-L tile (correct, masked stores)
    bpc = (2 * (2 * c_in + c_out) * 2          # double-buffered bf16 x(+prev)/out blocks
           + ksize * (c_in + c_out) * 2        # bf16 im2col staging operands
           + 3 * c_out * 4)                    # f32 conv1/conv2 intermediates
    cap = (max(1, _ACT_VMEM_BUDGET // max(bpc, 1)) // 128) * 128
    cap = max(128, min(2048, cap))
    if max_tile_l is not None:
        cap = max(128, min(cap, max_tile_l))
    best = None
    t = 128
    while t <= min(cap, length):
        if length % t == 0 and t >= 2 * pad:
            best = t
        t += 128
    return best if best is not None else length  # single tile needs no halo at all


def _vmem_limit_bytes(c_in, c_out, ksize, tile_l, pad, has_prev, has_downsample):
    """Raise the scoped-VMEM limit only when the double-buffered weights + activation
    tiles would not fit the smallest per-generation default (16 MiB on v5e)."""
    nx = 2 if has_prev else 1
    act = 2 * (nx * c_in + c_out) * tile_l * 2
    wts = (2 * 2 * (ksize * c_in * c_out + ksize * c_out * c_out
                    + (c_in * c_out if has_downsample else 0))
           + 2 * 3 * c_out * 4)
    stage = (ksize * (c_in + c_out) * (tile_l + 2 * pad)) * 2 \
        + 3 * c_out * (tile_l + pad) * 4
    need = act + wts + stage + (2 << 20)
    return None if need <= (16 << 20) else min(need, 48 << 20)


def _temporal_block_kernel(*refs, ksize, dilation, pad, tile_l, res_off,
                           has_prev, has_downsample):
    """One (batch, L-tile) step of a TemporalBlock.  Refs, in order:
       x (C_in, TL) bf16, [x_prev (C_in, TL) bf16], w1 (C_out, K*C_in) bf16,
       t1 (C_out, 1) f32, w2 (C_out, K*C_out) bf16, t2 (C_out, 1) f32,
       [wd (C_out, C_in) bf16, bd (C_out, 1) f32], out (C_out, TL) bf16."""
    f32 = jnp.float32
    bf16 = jnp.bfloat16

    i = 0
    x_ref = refs[i]; i += 1
    xp_ref = None
    if has_prev:
        xp_ref = refs[i]; i += 1
    w1_ref, t1_ref, w2_ref, t2_ref = refs[i:i + 4]; i += 4
    wd_ref = bd_ref = None
    if has_downsample:
        wd_ref, bd_ref = refs[i:i + 2]; i += 2
    out_ref = refs[i]

    t_idx = pl.program_id(1)
    c_in = x_ref.shape[0]

    # x window with a 2*pad-wide causal left halo, bf16:  xh[:, i] == x[:, ts - 2*pad + i]
    if has_prev:
        halo = xp_ref[:, tile_l - 2 * pad:]                        # last cols of tile t-1
        halo = jnp.where(t_idx > 0, halo, jnp.zeros_like(halo))    # zeros before t == 0
    else:
        halo = jnp.zeros((c_in, 2 * pad), bf16)
    xh = jnp.concatenate([halo, x_ref[...]], axis=-1)              # (C_in, TL + 2*pad)

    # ---- conv1 (+ folded BN1) over output columns [ts - pad, ts + TL): one MXU
    # contraction over K*C_in.  NOTE: the tap staging (slices + axis-0 concat) is real
    # XLU/copy work, not free; for very large C switch to K accumulate-dots / VMEM slab.
    n1 = tile_l + pad
    s1 = jnp.concatenate(
        [xh[:, j * dilation: j * dilation + n1] for j in range(ksize)], axis=0)
    h1 = jnp.maximum(
        jnp.dot(w1_ref[...], s1, preferred_element_type=f32) + t1_ref[...], 0.0)
    # Columns at absolute time < 0 model the zero left-padding of the ReLU output that
    # conv2 consumes (not relu(shift)) -> force them to exactly zero.
    col = jax.lax.broadcasted_iota(jnp.int32, (1, n1), 1)
    h1 = jnp.where(t_idx * tile_l - pad + col >= 0, h1, 0.0).astype(bf16)

    # ---- conv2 (+ folded BN2) over output columns [ts, ts + TL) ----
    s2 = jnp.concatenate(
        [h1[:, j * dilation: j * dilation + tile_l] for j in range(ksize)], axis=0)
    h2 = jnp.maximum(
        jnp.dot(w2_ref[...], s2, preferred_element_type=f32) + t2_ref[...], 0.0)

    # ---- residual: 1x1 downsample conv on x[t - 2*pad], or identity x[t - pad].
    # This matches THIS module's forward (it pads x before conv1, and pads that padded x
    # again before the downsample), not the canonical locuslab TCN which adds x[t].
    if has_downsample:
        res = jnp.dot(wd_ref[...], xh[:, res_off: res_off + tile_l],
                      preferred_element_type=f32) + bd_ref[...]
    else:
        res = xh[:, res_off: res_off + tile_l].astype(f32)

    out_ref[...] = jnp.maximum(h2 + res, 0.0).astype(out_ref.dtype)


def temporal_block(x, p, *, kernel_size, dilation, max_tile_l=None):
    """x: (N, C_in, L), L ideally a multiple of 128. Returns (N, C_out, L) bfloat16."""
    n, c_in, length = x.shape
    c_out = p["w1"].shape[0]
    pad = (kernel_size - 1) * dilation
    assert pad > 0, "kernel_size must be > 1"

    tile_l = _choose_tile(length, c_in, c_out, kernel_size, pad, max_tile_l)
    n_tiles = length // tile_l
    has_prev = n_tiles > 1
    has_downsample = p.get("wd") is not None

    # --- host-side parameter setup: fold BN scale into weights, stack conv taps ---
    def fold(w, b, g, beta, m, v):
        scale = g / jnp.sqrt(v + _EPS)                              # (C_out,)
        shift = beta + (b - m) * scale                              # (C_out,)
        w_folded = w * scale[:, None, None]                         # (C_out, C_in, K)
        # stacked-operand rows are ordered (tap j, channel c) -> row j*C_in + c
        w_stacked = jnp.transpose(w_folded, (0, 2, 1)).reshape(c_out, -1)
        return (w_stacked.astype(jnp.bfloat16),
                shift.reshape(c_out, 1).astype(jnp.float32))

    w1s, t1 = fold(p["w1"], p["b1"], p["g1"], p["beta1"], p["m1"], p["v1"])
    w2s, t2 = fold(p["w2"], p["b2"], p["g2"], p["beta2"], p["m2"], p["v2"])

    x_bf16 = x.astype(jnp.bfloat16)
    args = [x_bf16]
    in_specs = [pl.BlockSpec((None, c_in, tile_l), lambda b, t: (b, 0, t))]
    if has_prev:
        # Overlapping halo fetch: previous L-tile of x (clamped at t == 0 and zero-masked
        # in-kernel).  No serial carry -> both grid axes stay independent/parallel.
        in_specs.append(pl.BlockSpec((None, c_in, tile_l),
                                     lambda b, t: (b, 0, jnp.maximum(t - 1, 0))))
        args.append(x_bf16)

    def wspec(shape):
        # Grid-invariant weights: constant block index, so Pallas skips re-DMA between
        # consecutive grid steps (double-buffer VMEM still allocated -> vmem_limit below).
        return pl.BlockSpec(shape, lambda b, t: (0, 0))

    in_specs += [wspec((c_out, kernel_size * c_in)), wspec((c_out, 1)),
                 wspec((c_out, kernel_size * c_out)), wspec((c_out, 1))]
    args += [w1s, t1, w2s, t2]

    if has_downsample:
        in_specs += [wspec((c_out, c_in)), wspec((c_out, 1))]
        args += [p["wd"][:, :, 0].astype(jnp.bfloat16),
                 p["bd"].reshape(c_out, 1).astype(jnp.float32)]
        res_off = 0        # module pads the already-padded x again -> shift of 2*pad
    else:
        assert c_in == c_out, "identity residual requires C_in == C_out"
        res_off = pad      # residual sees padded x truncated to L -> shift of pad

    kern = functools.partial(
        _temporal_block_kernel, ksize=kernel_size, dilation=dilation, pad=pad,
        tile_l=tile_l, res_off=res_off, has_prev=has_prev, has_downsample=has_downsample)

    grid_spec = pltpu.PrefetchScalarGridSpec(
        num_scalar_prefetch=0,
        grid=(n, n_tiles),
        in_specs=in_specs,
        out_specs=pl.BlockSpec((None, c_out, tile_l), lambda b, t: (b, 0, t)))

    return pl.pallas_call(
        kern,
        out_shape=jax.ShapeDtypeStruct((n, c_out, length), jnp.bfloat16),
        grid_spec=grid_spec,
        compiler_params=pltpu.CompilerParams(
            dimension_semantics=("parallel", "parallel"),
            vmem_limit_bytes=_vmem_limit_bytes(c_in, c_out, kernel_size, tile_l, pad,
                                               has_prev, has_downsample)),
    )(*args)


def temporal_conv_net(x, layer_params, *, kernel_size=3, max_tile_l=None):
    """Full TCN: x (N, C0, L) f32 -> (N, C_last, L) f32. dilation of layer i is 2**i."""
    _, _, length = x.shape
    # Pad L once to a lane-dense multiple of 128 (unmasked stores); causal convs never
    # look right, so columns [0, L) stay exact and the padded tail is sliced off at the end.
    lpad = ((length + 127) // 128) * 128
    h = x.astype(jnp.bfloat16)
    if lpad != length:
        h = jnp.pad(h, ((0, 0), (0, 0), (0, lpad - length)))
    for i, p in enumerate(layer_params):
        h = temporal_block(h, p, kernel_size=kernel_size, dilation=2 ** i,
                           max_tile_l=max_tile_l)
    return h[:, :, :length].astype(jnp.float32)


# ---------------- pure-JAX f32 reference (mirrors the PyTorch forward, eval mode) --------
def _reference_block(x, p, *, kernel_size, dilation):
    pad = (kernel_size - 1) * dilation

    def conv(a, w, b, dil):
        y = jax.lax.conv_general_dilated(
            a, w, window_strides=(1,), padding="VALID", rhs_dilation=(dil,),
            dimension_numbers=("NCH", "OIH", "NCH"),
            precision=jax.lax.Precision.HIGHEST)
        return y + b[None, :, None]

    def bn(a, g, beta, m, v):
        return ((a - m[None, :, None]) * (g / jnp.sqrt(v + _EPS))[None, :, None]
                + beta[None, :, None])

    xp = jnp.pad(x, ((0, 0), (0, 0), (pad, 0)))
    out = jax.nn.relu(bn(conv(xp, p["w1"], p["b1"], dilation),
                         p["g1"], p["beta1"], p["m1"], p["v1"]))
    out = jnp.pad(out, ((0, 0), (0, 0), (pad, 0)))
    out = jax.nn.relu(bn(conv(out, p["w2"], p["b2"], dilation),
                         p["g2"], p["beta2"], p["m2"], p["v2"]))
    length = out.shape[2]
    if p.get("wd") is not None:
        x2 = jnp.pad(xp, ((0, 0), (0, 0), (pad, 0)))
        res = conv(x2, p["wd"], p["bd"], 1)[:, :, :length]
    else:
        res = xp[:, :, :length]
    return jax.nn.relu(out + res)


def reference_tcn(x, layer_params, *, kernel_size=3):
    h = x
    for i, p in enumerate(layer_params):
        h = _reference_block(h, p, kernel_size=kernel_size, dilation=2 ** i)
    return h


if __name__ == "__main__":
    # TemporalConvNet(num_inputs=4, num_channels=[8, 8, 8], kernel_size=3):
    #   layer 0: 4 -> 8, dilation 1 (1x1 downsample residual)
    #   layer 1: 8 -> 8, dilation 2 (identity residual)
    #   layer 2: 8 -> 8, dilation 4 (identity residual)
    N, C_IN, L = 2, 4, 16
    CHANNELS = [8, 8, 8]
    KSIZE = 3

    key = jax.random.PRNGKey(0)
    keys = jax.random.split(key, len(CHANNELS) + 2)

    def block_params(k, c_in, c_out):
        ks = jax.random.split(k, 14)
        p = {
            "w1": 0.3 * jax.random.normal(ks[0], (c_out, c_in, KSIZE), jnp.float32),
            "b1": 0.1 * jax.random.normal(ks[1], (c_out,), jnp.float32),
            "g1": 1.0 + 0.1 * jax.random.normal(ks[2], (c_out,), jnp.float32),
            "beta1": 0.1 * jax.random.normal(ks[3], (c_out,), jnp.float32),
            "m1": 0.1 * jax.random.normal(ks[4], (c_out,), jnp.float32),
            "v1": jax.random.uniform(ks[5], (c_out,), jnp.float32, 0.5, 1.5),
            "w2": 0.3 * jax.random.normal(ks[6], (c_out, c_out, KSIZE), jnp.float32),
            "b2": 0.1 * jax.random.normal(ks[7], (c_out,), jnp.float32),
            "g2": 1.0 + 0.1 * jax.random.normal(ks[8], (c_out,), jnp.float32),
            "beta2": 0.1 * jax.random.normal(ks[9], (c_out,), jnp.float32),
            "m2": 0.1 * jax.random.normal(ks[10], (c_out,), jnp.float32),
            "v2": jax.random.uniform(ks[11], (c_out,), jnp.float32, 0.5, 1.5),
        }
        if c_in != c_out:
            p["wd"] = 0.3 * jax.random.normal(ks[12], (c_out, c_in, 1), jnp.float32)
            p["bd"] = 0.1 * jax.random.normal(ks[13], (c_out,), jnp.float32)
        else:
            p["wd"] = None
            p["bd"] = None
        return p

    layer_params = []
    c_prev = C_IN
    for i, c_out in enumerate(CHANNELS):
        layer_params.append(block_params(keys[i], c_prev, c_out))
        c_prev = c_out

    def check(x, max_tile_l=None):
        out = jax.block_until_ready(
            temporal_conv_net(x, layer_params, kernel_size=KSIZE, max_tile_l=max_tile_l))
        ref = jax.block_until_ready(reference_tcn(x, layer_params, kernel_size=KSIZE))
        assert out.shape == ref.shape, (out.shape, ref.shape)
        # bf16 MXU pipeline vs fp32 reference: scale-normalized Linf bound.
        max_err = float(jnp.max(jnp.abs(out - ref)))
        ref_scale = float(jnp.max(jnp.abs(ref))) + 1e-6
        assert max_err / ref_scale < 0.05, f"relative Linf err = {max_err / ref_scale}"

    # 1) small shape from the module spec (host-padded to one 128-wide L tile)
    x = jax.random.normal(keys[-2], (N, C_IN, L), jnp.float32)
    check(x)

    # 2) multi-tile configuration exercising the overlapping-halo path
    #    (L=300 -> padded to 384; tile forced to 128 -> 3 L-tiles per batch element)
    x_long = jax.random.normal(keys[-1], (N, C_IN, 300), jnp.float32)
    check(x_long, max_tile_l=128)

    print("KERNEL_OK")
</pallas_src>

<mosaic_0001>
module attributes {stable_mosaic.version = 11 : i64} {
  func.func @_temporal_block_kernel(%arg0: i32, %arg1: i32, %arg2: memref<1x4x128xbf16, #tpu.memory_space<vmem>>, %arg3: memref<8x12xbf16, #tpu.memory_space<vmem>>, %arg4: memref<8x1xf32, #tpu.memory_space<vmem>>, %arg5: memref<8x24xbf16, #tpu.memory_space<vmem>>, %arg6: memref<8x1xf32, #tpu.memory_space<vmem>>, %arg7: memref<8x4xbf16, #tpu.memory_space<vmem>>, %arg8: memref<8x1xf32, #tpu.memory_space<vmem>>, %arg9: memref<1x8x128xbf16, #tpu.memory_space<vmem>>) attributes {dimension_semantics = [#tpu.dimension_semantics<parallel>, #tpu.dimension_semantics<parallel>], iteration_bounds = array<i64: 2, 1>, scalar_prefetch = 0 : i64, scratch_operands = 0 : i64, tpu.core_type = #tpu.core_type<tc>, window_params = [{transform_indices = @transform_0, window_bounds = array<i64: 1, 4, 128>}, {pipeline_mode = #tpu.pipeline_mode<synchronous>, transform_indices = @transform_1, window_bounds = array<i64: 8, 12>}, {pipeline_mode = #tpu.pipeline_mode<synchronous>, transform_indices = @transform_2, window_bounds = array<i64: 8, 1>}, {pipeline_mode = #tpu.pipeline_mode<synchronous>, transform_indices = @transform_3, window_bounds = array<i64: 8, 24>}, {pipeline_mode = #tpu.pipeline_mode<synchronous>, transform_indices = @transform_4, window_bounds = array<i64: 8, 1>}, {pipeline_mode = #tpu.pipeline_mode<synchronous>, transform_indices = @transform_5, window_bounds = array<i64: 8, 4>}, {pipeline_mode = #tpu.pipeline_mode<synchronous>, transform_indices = @transform_6, window_bounds = array<i64: 8, 1>}, {transform_indices = @transform_7, window_bounds = array<i64: 1, 8, 128>}]} {
    %cst = arith.constant 0.000000e+00 : bf16
    %0 = vector.broadcast %cst : bf16 to vector<4x4xbf16>
    %c0 = arith.constant 0 : index
    %c0_0 = arith.constant 0 : index
    %c0_1 = arith.constant 0 : index
    %1 = vector.load %arg2[%c0, %c0_0, %c0_1] : memref<1x4x128xbf16, #tpu.memory_space<vmem>>, vector<1x4x128xbf16>
    %2 = vector.shape_cast %1 : vector<1x4x128xbf16> to vector<4x128xbf16>
    %3 = tpu.concatenate %0, %2 in 1 : vector<4x4xbf16>, vector<4x128xbf16> -> vector<4x132xbf16>
    %4 = vector.extract_strided_slice %3 {offsets = [0, 0], sizes = [4, 130], strides = [1, 1]} : vector<4x132xbf16> to vector<4x130xbf16>
    %5 = vector.extract_strided_slice %3 {offsets = [0, 1], sizes = [4, 130], strides = [1, 1]} : vector<4x132xbf16> to vector<4x130xbf16>
    %6 = vector.extract_strided_slice %3 {offsets = [0, 2], sizes = [4, 130], strides = [1, 1]} : vector<4x132xbf16> to vector<4x130xbf16>
    %7 = tpu.concatenate %4, %5, %6 in 0 : vector<4x130xbf16>, vector<4x130xbf16>, vector<4x130xbf16> -> vector<12x130xbf16>
    %c0_2 = arith.constant 0 : index
    %c0_3 = arith.constant 0 : index
    %8 = vector.load %arg3[%c0_2, %c0_3] : memref<8x12xbf16, #tpu.memory_space<vmem>>, vector<8x12xbf16>
    %cst_4 = arith.constant dense<0.000000e+00> : vector<8x130xf32>
    %9 = tpu.matmul %8, %7, %cst_4 {dimension_numbers = #tpu.dot_dimension_numbers<[1], [0], [0], [1], [0, 0, 1, 1], [], []>} : vector<8x12xbf16>, vector<12x130xbf16>, vector<8x130xf32> -> vector<8x130xf32>
    %c0_5 = arith.constant 0 : index
    %c0_6 = arith.constant 0 : index
    %10 = vector.load %arg4[%c0_5, %c0_6] : memref<8x1xf32, #tpu.memory_space<vmem>>, vector<8x1xf32>
    %11 = vector.broadcast %10 : vector<8x1xf32> to vector<8x130xf32>
    %12 = arith.addf %9, %11 : vector<8x130xf32>
    %cst_7 = arith.constant 0.000000e+00 : f32
    %13 = vector.broadcast %cst_7 : f32 to vector<8x130xf32>
    %14 = arith.maximumf %12, %13 : vector<8x130xf32>
    %15 = tpu.iota {dimensions = array<i32: 1>} : vector<1x130xi32>
    %c128_i32 = arith.constant 128 : i32
    %16 = arith.muli %arg1, %c128_i32 : i32
    %c2_i32 = arith.constant 2 : i32
    %17 = arith.subi %16, %c2_i32 : i32
    %18 = vector.broadcast %17 : i32 to vector<1x130xi32>
    %19 = arith.addi %18, %15 : vector<1x130xi32>
    %c0_i32 = arith.constant 0 : i32
    %20 = vector.broadcast %c0_i32 : i32 to vector<1x130xi32>
    %21 = arith.cmpi sge, %19, %20 : vector<1x130xi32>
    %cst_8 = arith.constant 0.000000e+00 : f32
    %22 = vector.shape_cast %21 : vector<1x130xi1> to vector<1x130xi1>
    %23 = vector.broadcast %22 : vector<1x130xi1> to vector<8x130xi1>
    %24 = vector.broadcast %cst_8 : f32 to vector<8x130xf32>
    %25 = arith.select %23, %14, %24 : vector<8x130xi1>, vector<8x130xf32>
    %26 = arith.truncf %25 : vector<8x130xf32> to vector<8x130xbf16>
    %27 = vector.extract_strided_slice %26 {offsets = [0, 0], sizes = [8, 128], strides = [1, 1]} : vector<8x130xbf16> to vector<8x128xbf16>
    %28 = vector.extract_strided_slice %26 {offsets = [0, 1], sizes = [8, 128], strides = [1, 1]} : vector<8x130xbf16> to vector<8x128xbf16>
    %29 = vector.extract_strided_slice %26 {offsets = [0, 2], sizes = [8, 128], strides = [1, 1]} : vector<8x130xbf16> to vector<8x128xbf16>
    %30 = tpu.concatenate %27, %28, %29 in 0 : vector<8x128xbf16>, vector<8x128xbf16>, vector<8x128xbf16> -> vector<24x128xbf16>
    %c0_9 = arith.constant 0 : index
    %c0_10 = arith.constant 0 : index
    %31 = vector.load %arg5[%c0_9, %c0_10] : memref<8x24xbf16, #tpu.memory_space<vmem>>, vector<8x24xbf16>
    %cst_11 = arith.constant dense<0.000000e+00> : vector<8x128xf32>
    %32 = tpu.matmul %31, %30, %cst_11 {dimension_numbers = #tpu.dot_dimension_numbers<[1], [0], [0], [1], [0, 0, 1, 1], [], []>} : vector<8x24xbf16>, vector<24x128xbf16>, vector<8x128xf32> -> vector<8x128xf32>
    %c0_12 = arith.constant 0 : index
    %c0_13 = arith.constant 0 : index
    %33 = vector.load %arg6[%c0_12, %c0_13] : memref<8x1xf32, #tpu.memory_space<vmem>>, vector<8x1xf32>
    %34 = vector.broadcast %33 : vector<8x1xf32> to vector<8x128xf32>
    %35 = arith.addf %32, %34 : vector<8x128xf32>
    %cst_14 = arith.constant 0.000000e+00 : f32
    %36 = vector.broadcast %cst_14 : f32 to vector<8x128xf32>
    %37 = arith.maximumf %35, %36 : vector<8x128xf32>
    %c0_15 = arith.constant 0 : index
    %c0_16 = arith.constant 0 : index
    %38 = vector.load %arg7[%c0_15, %c0_16] : memref<8x4xbf16, #tpu.memory_space<vmem>>, vector<8x4xbf16>
    %39 = vector.extract_strided_slice %3 {offsets = [0, 0], sizes = [4, 128], strides = [1, 1]} : vector<4x132xbf16> to vector<4x128xbf16>
    %cst_17 = arith.constant dense<0.000000e+00> : vector<8x128xf32>
    %40 = tpu.matmul %38, %39, %cst_17 {dimension_numbers = #tpu.dot_dimension_numbers<[1], [0], [0], [1], [0, 0, 1, 1], [], []>} : vector<8x4xbf16>, vector<4x128xbf16>, vector<8x128xf32> -> vector<8x128xf32>
    %c0_18 = arith.constant 0 : index
    %c0_19 = arith.constant 0 : index
    %41 = vector.load %arg8[%c0_18, %c0_19] : memref<8x1xf32, #tpu.memory_space<vmem>>, vector<8x1xf32>
    %42 = vector.broadcast %41 : vector<8x1xf32> to vector<8x128xf32>
    %43 = arith.addf %40, %42 : vector<8x128xf32>
    %44 = arith.addf %37, %43 : vector<8x128xf32>
    %cst_20 = arith.constant 0.000000e+00 : f32
    %45 = vector.broadcast %cst_20 : f32 to vector<8x128xf32>
    %46 = arith.maximumf %44, %45 : vector<8x128xf32>
    %47 = arith.truncf %46 : vector<8x128xf32> to vector<8x128xbf16>
    %c0_21 = arith.constant 0 : index
    %c0_22 = arith.constant 0 : index
    %c0_23 = arith.constant 0 : index
    %48 = vector.load %arg9[%c0_21, %c0_22, %c0_23] : memref<1x8x128xbf16, #tpu.memory_space<vmem>>, vector<1x8x128xbf16>
    %49 = vector.shape_cast %48 : vector<1x8x128xbf16> to vector<8x128xbf16>
    %50 = vector.shape_cast %47 : vector<8x128xbf16> to vector<1x8x128xbf16>
    tpu.vector_store %arg9[%c0_21, %c0_22, %c0_23], %50 {strides = array<i32>} : memref<1x8x128xbf16, #tpu.memory_space<vmem>>, vector<1x8x128xbf16>,
    return
  }
  func.func @transform_0(%arg0: i32, %arg1: i32) -> (i32, i32, i32) {
    %c0_i32 = arith.constant 0 : i32
    %c0_i32_0 = arith.constant 0 : i32
    return %arg0, %c0_i32, %arg1 : i32, i32, i32
  }
  func.func @transform_1(%arg0: i32, %arg1: i32) -> (i32, i32) {
    %c0_i32 = arith.constant 0 : i32
    %c0_i32_0 = arith.constant 0 : i32
    %c0_i32_1 = arith.constant 0 : i32
    return %c0_i32, %c0_i32_0 : i32, i32
  }
  func.func @transform_2(%arg0: i32, %arg1: i32) -> (i32, i32) {
    %c0_i32 = arith.constant 0 : i32
    %c0_i32_0 = arith.constant 0 : i32
    %c0_i32_1 = arith.constant 0 : i32
    return %c0_i32, %c0_i32_0 : i32, i32
  }
  func.func @transform_3(%arg0: i32, %arg1: i32) -> (i32, i32) {
    %c0_i32 = arith.constant 0 : i32
    %c0_i32_0 = arith.constant 0 : i32
    %c0_i32_1 = arith.constant 0 : i32
    return %c0_i32, %c0_i32_0 : i32, i32
  }
  func.func @transform_4(%arg0: i32, %arg1: i32) -> (i32, i32) {
    %c0_i32 = arith.constant 0 : i32
    %c0_i32_0 = arith.constant 0 : i32
    %c0_i32_1 = arith.constant 0 : i32
    return %c0_i32, %c0_i32_0 : i32, i32
  }
  func.func @transform_5(%arg0: i32, %arg1: i32) -> (i32, i32) {
    %c0_i32 = arith.constant 0 : i32
    %c0_i32_0 = arith.constant 0 : i32
    %c0_i32_1 = arith.constant 0 : i32
    return %c0_i32, %c0_i32_0 : i32, i32
  }
  func.func @transform_6(%arg0: i32, %arg1: i32) -> (i32, i32) {
    %c0_i32 = arith.constant 0 : i32
    %c0_i32_0 = arith.constant 0 : i32
    %c0_i32_1 = arith.constant 0 : i32
    return %c0_i32, %c0_i32_0 : i32, i32
  }
  func.func @transform_7(%arg0: i32, %arg1: i32) -> (i32, i32, i32) {
    %c0_i32 = arith.constant 0 : i32
    %c0_i32_0 = arith.constant 0 : i32
    return %arg0, %c0_i32, %arg1 : i32, i32, i32
  }
}

</mosaic_0001>

<llo_original>
// kernel: tpu_custom_call.1
$region0: #{tpu_custom_call.1}
  #allocation0 [shape = 'u32[]', space=smem, size = 0x4, offset = 0x4, fixed_abs, tag = 'smem constant byte address 0x4 - core index']
  #allocation1 [shape = 'u32[144,128]{1,0:T(1,128)}', space=vmem, size = 0x12000, scoped, tag = 'internal scratch']
  %s0 = inlined_call_operand.vmem [shape: bf16[2,4,128], index: 0, kind: input, shape index: {}]
  %s1 = inlined_call_operand.vmem [shape: bf16[8,12], index: 1, kind: input, shape index: {}]
  %s2 = inlined_call_operand.vmem [shape: f32[8,1], index: 2, kind: input, shape index: {}]
  %s3 = inlined_call_operand.vmem [shape: bf16[8,24], index: 3, kind: input, shape index: {}]
  %s4 = inlined_call_operand.vmem [shape: f32[8,1], index: 4, kind: input, shape index: {}]
  %s5 = inlined_call_operand.vmem [shape: bf16[8,4], index: 5, kind: input, shape index: {}]
  %s6 = inlined_call_operand.vmem [shape: f32[8,1], index: 6, kind: input, shape index: {}]
  %s7 = inlined_call_operand.hbm [shape: bf16[2,8,128], index: 7, kind: output, shape index: {}]
  %s8 = sld [smem:[#allocation0]]
  $region61: #{tpu_custom_call.1} parent=0
    _
  %s10 = ssub.s32 1, %s8
  %s11 = scalar_select 0, %s10, %s8
  $region1: #{tpu_custom_call.1} parent=0
    #allocation2 [shape = 'u8[4096]{0}', space=vmem, size = 0x1000, scoped, tag = 'output window, operand 0']
    #allocation3 [shape = 's32[2]{0}', space=sflag, size = 0x8, scoped, tag = 'scoped memory for tpu_custom_call.1']
    %12 = vsyncpa [#allocation3], 0
    %s13 = scalar_lea.sflag [#allocation3], 1
    %14 = vsyncpa %s13, 0
    loop: start=0, step=1, limit=4
    $region2: #{tpu_custom_call.1} parent=1 // loop_pre_header
      _
    $region3: #{tpu_custom_call.1} parent=1 // loop_header
      %s16 = sphi 0, %s20
      %p17 = scmp.ge.s32.totalorder %s16, 4
      %s23 = sphi 0, %s35
      %s24 = sphi 0, %s31
      %s25 = sphi 0, %s23
      %s26 = sphi 0, %s24
      %s27 = sphi 0, %s25
      %s28 = sphi 0, %s26
      %s40 = sphi 0, %s42
      %s43 = sphi 0, %s40
      %s44 = sphi 0, %s43
      %s60 = sphi 0, %s44
      %s64 = sphi 0, %s64
      %s66 = sphi 0, %s64
      %s67 = sphi 0, %s66
      %s81 = sphi 0, %s67
      %s85 = sphi 0, %s85
      %s87 = sphi 0, %s85
      %s88 = sphi 0, %s87
      %s102 = sphi 0, %s88
      %s106 = sphi 0, %s106
      %s108 = sphi 0, %s106
      %s109 = sphi 0, %s108
      %s123 = sphi 0, %s109
      %s127 = sphi 0, %s127
      %s129 = sphi 0, %s127
      %s130 = sphi 0, %s129
      %s144 = sphi 0, %s130
      %s148 = sphi 0, %s148
      %s150 = sphi 0, %s148
      %s151 = sphi 0, %s150
      %s165 = sphi 0, %s151
      %s169 = sphi 0, %s169
      %s171 = sphi 0, %s169
      %s172 = sphi 0, %s171
      %s186 = sphi 0, %s172
      %s194 = sphi 0, %s196
      %s197 = sphi 0, %s194
      %s198 = sphi 0, %s197
      %s214 = sphi 0, %s198
    $region4: #{tpu_custom_call.1} parent=1 // loop_header_branch
      %19 = sbr.rel (%p17) target = $region8
    $region5: #{tpu_custom_call.1} parent=1 // loop_body
      %s21 = ssub.s32 %s16, 1
      %s22 = ssub.s32 %s16, 2
      %s29 = sadd.s32 1, %s24
      %p30 = scmp.ge.s32.totalorder %s29, 1
      %s31 = scalar_select %p30, 0, %s29
      %s32 = sadd.s32 1, %s23
      %s33 = scalar_select %p30, %s32, %s23
      %p34 = scmp.ge.s32.totalorder %s33, 2
      %s35 = scalar_select %p34, 0, %s33
      %s36 = ssub.s32 %s23, %s35
      %s37 = ssub.s32 %s24, %s31
      %s38 = sor.u32 %s36, %s37
      %p39 = scmp.eq.s32.totalorder %s38, 0
      %s41 = sadd.s32 %s40, 1
      %s42 = scalar_select %p39, %s40, %s41
      %p45 = pneg %p39
      %p46 = scmp.eq.s32.totalorder %s16, 1
      %p47 = por %p45, %p46
      %p48 = scmp.ne.s32.totalorder %s40, %s43
      %p49 = scmp.eq.s32.totalorder %s16, 0
      %p50 = por %p48, %p49
      %p51 = scmp.ne.s32.totalorder %s40, %s43
      %p52 = scmp.eq.s32.totalorder %s21, 1
      %p53 = por %p51, %p52
      %p54 = scmp.ne.s32.totalorder %s43, %s44
      %p55 = scmp.eq.s32.totalorder %s21, 0
      %p56 = por %p54, %p55
      %p57 = scmp.ne.s32.totalorder %s43, %s44
      %p58 = scmp.eq.s32.totalorder %s22, 1
      %p59 = por %p57, %p58
      %p61 = scmp.ne.s32.totalorder %s44, %s60
      %p62 = scmp.eq.s32.totalorder %s22, 0
      %p63 = por %p61, %p62
      %s65 = sadd.s32 %s64, 1
      %p68 = scmp.eq.s32.totalorder %s16, 1
      %p69 = scmp.ne.s32.totalorder %s64, %s66
      %p70 = scmp.eq.s32.totalorder %s16, 0
      %p71 = por %p69, %p70
      %p72 = scmp.ne.s32.totalorder %s64, %s66
      %p73 = scmp.eq.s32.totalorder %s21, 1
      %p74 = por %p72, %p73
      %p75 = scmp.ne.s32.totalorder %s66, %s67
      %p76 = scmp.eq.s32.totalorder %s21, 0
      %p77 = por %p75, %p76
      %p78 = scmp.ne.s32.totalorder %s66, %s67
      %p79 = scmp.eq.s32.totalorder %s22, 1
      %p80 = por %p78, %p79
      %p82 = scmp.ne.s32.totalorder %s67, %s81
      %p83 = scmp.eq.s32.totalorder %s22, 0
      %p84 = por %p82, %p83
      %s86 = sadd.s32 %s85, 1
      %p89 = scmp.eq.s32.totalorder %s16, 1
      %p90 = scmp.ne.s32.totalorder %s85, %s87
      %p91 = scmp.eq.s32.totalorder %s16, 0
      %p92 = por %p90, %p91
      %p93 = scmp.ne.s32.totalorder %s85, %s87
      %p94 = scmp.eq.s32.totalorder %s21, 1
      %p95 = por %p93, %p94
      %p96 = scmp.ne.s32.totalorder %s87, %s88
      %p97 = scmp.eq.s32.totalorder %s21, 0
      %p98 = por %p96, %p97
      %p99 = scmp.ne.s32.totalorder %s87, %s88
      %p100 = scmp.eq.s32.totalorder %s22, 1
      %p101 = por %p99, %p100
      %p103 = scmp.ne.s32.totalorder %s88, %s102
      %p104 = scmp.eq.s32.totalorder %s22, 0
      %p105 = por %p103, %p104
      %s107 = sadd.s32 %s106, 1
      %p110 = scmp.eq.s32.totalorder %s16, 1
      %p111 = scmp.ne.s32.totalorder %s106, %s108
      %p112 = scmp.eq.s32.totalorder %s16, 0
      %p113 = por %p111, %p112
      %p114 = scmp.ne.s32.totalorder %s106, %s108
      %p115 = scmp.eq.s32.totalorder %s21, 1
      %p116 = por %p114, %p115
      %p117 = scmp.ne.s32.totalorder %s108, %s109
      %p118 = scmp.eq.s32.totalorder %s21, 0
      %p119 = por %p117, %p118
      %p120 = scmp.ne.s32.totalorder %s108, %s109
      %p121 = scmp.eq.s32.totalorder %s22, 1
      %p122 = por %p120, %p121
      %p124 = scmp.ne.s32.totalorder %s109, %s123
      %p125 = scmp.eq.s32.totalorder %s22, 0
      %p126 = por %p124, %p125
      %s128 = sadd.s32 %s127, 1
      %p131 = scmp.eq.s32.totalorder %s16, 1
      %p132 = scmp.ne.s32.totalorder %s127, %s129
      %p133 = scmp.eq.s32.totalorder %s16, 0
      %p134 = por %p132, %p133
      %p135 = scmp.ne.s32.totalorder %s127, %s129
      %p136 = scmp.eq.s32.totalorder %s21, 1
      %p137 = por %p135, %p136
      %p138 = scmp.ne.s32.totalorder %s129, %s130
      %p139 = scmp.eq.s32.totalorder %s21, 0
      %p140 = por %p138, %p139
      %p141 = scmp.ne.s32.totalorder %s129, %s130
      %p142 = scmp.eq.s32.totalorder %s22, 1
      %p143 = por %p141, %p142
      %p145 = scmp.ne.s32.totalorder %s130, %s144
      %p146 = scmp.eq.s32.totalorder %s22, 0
      %p147 = por %p145, %p146
      %s149 = sadd.s32 %s148, 1
      %p152 = scmp.eq.s32.totalorder %s16, 1
      %p153 = scmp.ne.s32.totalorder %s148, %s150
      %p154 = scmp.eq.s32.totalorder %s16, 0
      %p155 = por %p153, %p154
      %p156 = scmp.ne.s32.totalorder %s148, %s150
      %p157 = scmp.eq.s32.totalorder %s21, 1
      %p158 = por %p156, %p157
      %p159 = scmp.ne.s32.totalorder %s150, %s151
      %p160 = scmp.eq.s32.totalorder %s21, 0
      %p161 = por %p159, %p160
      %p162 = scmp.ne.s32.totalorder %s150, %s151
      %p163 = scmp.eq.s32.totalorder %s22, 1
      %p164 = por %p162, %p163
      %p166 = scmp.ne.s32.totalorder %s151, %s165
      %p167 = scmp.eq.s32.totalorder %s22, 0
      %p168 = por %p166, %p167
      %s170 = sadd.s32 %s169, 1
      %p173 = scmp.eq.s32.totalorder %s16, 1
      %p174 = scmp.ne.s32.totalorder %s169, %s171
      %p175 = scmp.eq.s32.totalorder %s16, 0
      %p176 = por %p174, %p175
      %p177 = scmp.ne.s32.totalorder %s169, %s171
      %p178 = scmp.eq.s32.totalorder %s21, 1
      %p179 = por %p177, %p178
      %p180 = scmp.ne.s32.totalorder %s171, %s172
      %p181 = scmp.eq.s32.totalorder %s21, 0
      %p182 = por %p180, %p181
      %p183 = scmp.ne.s32.totalorder %s171, %s172
      %p184 = scmp.eq.s32.totalorder %s22, 1
      %p185 = por %p183, %p184
      %p187 = scmp.ne.s32.totalorder %s172, %s186
      %p188 = scmp.eq.s32.totalorder %s22, 0
      %p189 = por %p187, %p188
      %s190 = ssub.s32 %s23, %s35
      %s191 = ssub.s32 %s24, %s31
      %s192 = sor.u32 %s190, %s191
      %p193 = scmp.eq.s32.totalorder %s192, 0
      %s195 = sadd.s32 %s194, 1
      %s196 = scalar_select %p193, %s194, %s195
      %p199 = pneg %p193
      %p200 = scmp.eq.s32.totalorder %s16, 1
      %p201 = por %p199, %p200
      %p202 = scmp.ne.s32.totalorder %s194, %s197
      %p203 = scmp.eq.s32.totalorder %s16, 0
      %p204 = por %p202, %p203
      %p205 = scmp.ne.s32.totalorder %s194, %s197
      %p206 = scmp.eq.s32.totalorder %s21, 1
      %p207 = por %p205, %p206
      %p208 = scmp.ne.s32.totalorder %s197, %s198
      %p209 = scmp.eq.s32.totalorder %s21, 0
      %p210 = por %p208, %p209
      %p211 = scmp.ne.s32.totalorder %s197, %s198
      %p212 = scmp.eq.s32.totalorder %s22, 1
      %p213 = por %p211, %p212
      %p215 = scmp.ne.s32.totalorder %s198, %s214
      %p216 = scmp.eq.s32.totalorder %s22, 0
      %p217 = por %p215, %p216
      %p218 = scmp.le.s32.totalorder 1, %s16
      %p219 = scmp.lt.s32.totalorder %s16, 3
      %p220 = pnand %p218, %p219
      %p221 = pneg %p220
      // Predicated region
      $region9: #{tpu_custom_call.1} parent=5 // pred_check
        _
      $region10: #{tpu_custom_call.1} parent=5 // pred_check_branch
        %223 = sbr.rel (%p220) target = $region12
      $region11: #{tpu_custom_call.1} parent=5 // pred_region
        %s224 = ssub.s32 %s16, 1
        // Predicated region
        $region13: #{tpu_custom_call.1} parent=11 // pred_check
          %p225 = pneg %p77
        $region14: #{tpu_custom_call.1} parent=11 // pred_check_branch
          %227 = sbr.rel (%p225) target = $region16
        $region15: #{tpu_custom_call.1} parent=11 // pred_region
          _
        $region16: #{tpu_custom_call.1} parent=11 // pred_fallthru
          _
        // Predicated region
        $region17: #{tpu_custom_call.1} parent=11 // pred_check
          %p228 = pneg %p98
        $region18: #{tpu_custom_call.1} parent=11 // pred_check_branch
          %230 = sbr.rel (%p228) target = $region20
        $region19: #{tpu_custom_call.1} parent=11 // pred_region
          _
        $region20: #{tpu_custom_call.1} parent=11 // pred_fallthru
          _
        // Predicated region
        $region21: #{tpu_custom_call.1} parent=11 // pred_check
          %p231 = pneg %p119
        $region22: #{tpu_custom_call.1} parent=11 // pred_check_branch
          %233 = sbr.rel (%p231) target = $region24
        $region23: #{tpu_custom_call.1} parent=11 // pred_region
          _
        $region24: #{tpu_custom_call.1} parent=11 // pred_fallthru
          _
        // Predicated region
        $region25: #{tpu_custom_call.1} parent=11 // pred_check
          %p234 = pneg %p140
        $region26: #{tpu_custom_call.1} parent=11 // pred_check_branch
          %236 = sbr.rel (%p234) target = $region28
        $region27: #{tpu_custom_call.1} parent=11 // pred_region
          _
        $region28: #{tpu_custom_call.1} parent=11 // pred_fallthru
          _
        // Predicated region
        $region29: #{tpu_custom_call.1} parent=11 // pred_check
          %p237 = pneg %p161
        $region30: #{tpu_custom_call.1} parent=11 // pred_check_branch
          %239 = sbr.rel (%p237) target = $region32
        $region31: #{tpu_custom_call.1} parent=11 // pred_region
          _
        $region32: #{tpu_custom_call.1} parent=11 // pred_fallthru
          _
        // Predicated region
        $region33: #{tpu_custom_call.1} parent=11 // pred_check
          %p240 = pneg %p182
        $region34: #{tpu_custom_call.1} parent=11 // pred_check_branch
          %242 = sbr.rel (%p240) target = $region36
        $region35: #{tpu_custom_call.1} parent=11 // pred_region
          _
        $region36: #{tpu_custom_call.1} parent=11 // pred_fallthru
          _
      $region12: #{tpu_custom_call.1} parent=5 // pred_fallthru
        _
      %p243 = scmp.lt.s32.totalorder %s16, 2
      // Predicated region
      $region37: #{tpu_custom_call.1} parent=5 // pred_check
        %p244 = pneg %p243
      $region38: #{tpu_custom_call.1} parent=5 // pred_check_branch
        %246 = sbr.rel (%p244) target = $region40
      $region39: #{tpu_custom_call.1} parent=5 // pred_region
        // Predicated region
        $region41: #{tpu_custom_call.1} parent=39 // pred_check
          %p247 = pneg %p50
        $region42: #{tpu_custom_call.1} parent=39 // pred_check_branch
          %249 = sbr.rel (%p247) target = $region44
        $region43: #{tpu_custom_call.1} parent=39 // pred_region
          %p250 = scmp.lt.s32.totalorder %s23, 1
          %s251 = scalar_select %p250, %s23, 1
          %p252 = scmp.lt.s32.totalorder %s24, 0
          %s253 = scalar_select %p252, %s24, 0
          %s254 = sadd.s32 %s253, %s251
          %s255 = smul.addr %s254, 2
          %s256 = scalar_lea.vmem %s0, %s255
        $region44: #{tpu_custom_call.1} parent=39 // pred_fallthru
          _
      $region40: #{tpu_custom_call.1} parent=5 // pred_fallthru
        _
      %p257 = scmp.le.s32.totalorder 1, %s16
      %p258 = scmp.lt.s32.totalorder %s16, 3
      %p259 = pnand %p257, %p258
      %p260 = pneg %p259
      // Predicated region
      $region45: #{tpu_custom_call.1} parent=5 // pred_check
        _
      $region46: #{tpu_custom_call.1} parent=5 // pred_check_branch
        %262 = sbr.rel (%p259) target = $region48
      $region47: #{tpu_custom_call.1} parent=5 // pred_region
        %s263 = ssub.s32 %s16, 1
        %p264 = scmp.lt.s32.totalorder %s25, 1
        %s265 = scalar_select %p264, %s25, 1
        %p266 = scmp.lt.s32.totalorder %s26, 0
        %s267 = scalar_select %p266, %s26, 0
        %s268 = sadd.s32 %s267, %s265
        %s269 = smul.addr %s268, 2
        %s270 = scalar_lea.vmem %s0, %s269
        %p271 = pneg %p56
        %p272 = pneg %p53
        %p273 = pneg %p77
        %p274 = pneg %p74
        %p275 = pneg %p98
        %p276 = pneg %p95
        %p277 = pneg %p119
        %p278 = pneg %p116
        %p279 = pneg %p140
        %p280 = pneg %p137
        %p281 = pneg %p161
        %p282 = pneg %p158
        %p283 = pneg %p182
        %p284 = pneg %p179
        %p285 = pneg %p210
        %p286 = pneg %p207
        %s287 = sand.u32 %s197, 1
        %s288 = scalar_lea.sflag [#allocation3], %s287
        %s289 = sand.u32 %s197, 1
        %s290 = smul.addr %s289, 4
        %s291 = scalar_lea.vmem [#allocation2], %s290
        %p292 = scmp.lt.s32.totalorder %s25, 1
        %s293 = scalar_select %p292, %s25, 1
        %p294 = scmp.lt.s32.totalorder %s26, 0
        %s295 = scalar_select %p294, %s26, 0
        %s296 = sadd.s32 %s295, %s293
        %s297 = smul.addr %s296, 2
        %s298 = scalar_lea.vmem %s0, %s297
        %v300 = vld [vmem:[%s298] sm:$0x3]
        %v303 = vunpack.c.l.s4 1983009808
        %v304 = vunpack.c.0.s8 %v303
        %v305 = vlaneseq
        %v306 = vshrl.u32 %v305, 7
        %v307 = vsub.s32 %v304, %v306
        %v308 = vrot.slane %v300, %v307
        %309 = vrot.lane.b32.xlu0 %v308, 4
        %v310 = vpop.permute.xlu0 %309
        %vm311 = vcmask 31744
        %v314 = vsel %vm311, 0, %v310
        %v316 = vrot.slane %v314, 6
        %v317 = vrot.slane %v310, 6
        %318 = vrot.lane.b32.xlu0 %v316, 127
        %v319 = vpop.permute.xlu0 %318
        %320 = vrot.lane.b32.xlu0 %v317, 127
        %v321 = vpop.permute.xlu0 %320
        %vm322 = vcmask 1039360
        %v323 = vsel %vm322, %v319, %v321
        %v324 = vrot.slane %v314, 4
        %v325 = vrot.slane %v310, 4
        %326 = vrot.lane.b32.xlu0 %v324, 126
        %v327 = vpop.permute.xlu0 %326
        %328 = vrot.lane.b32.xlu0 %v325, 126
        %v329 = vpop.permute.xlu0 %328
        %vm330 = vcmask 1031168
        %v331 = vsel %vm330, %v327, %v329
        %vm332 = vcmask 1041408
        %v334 = vsel %vm332, %v314, %v323
        %v336 = vsel %vm332, %v310, %v321
        %vm337 = vcmask 1043456
        %v339 = vsel %vm337, %v334, %v331
        %v341 = vsel %vm337, %v336, %v329
        %v342 = vld [vmem:[%s1] sm:$0xf]
        %v343 = vld [vmem:[%s2] sm:$0xff]
        %345 = vset.pattern.permute.xlu0 0
        %346 = vperm.xlu0 %345, %v343
        %v347 = vpop.permute.xlu0 %346
        %vm349 = vcmask 97280
        %v351 = vsel %vm349, %v342, 0
        %vm353 = vcmask 1045504
        %v354 = vsel %vm353, %v339, 0
        %v356 = vsel %vm353, %v341, 0
        %358 = vmatprep.subr.bf16.mxu0 %v356
        %359 = vmatpush1.bf16.msra.mxu0 %v354
        %360 = vmatprep.subr.bf16.mxu0 0
        %361 = vmatpush1.bf16.msra.mxu0 0
        %362 = vmatprep.subr.bf16.mxu0 0
        %363 = vmatpush1.bf16.msra.mxu0 0
        %364 = vmatprep.subr.bf16.mxu0 0
        %365 = vmatpush1.bf16.msra.mxu0 0
        %366 = vmatprep.subr.bf16.mxu0 0
        %367 = vmatpush1.bf16.msra.mxu0 0
        %368 = vmatprep.subr.bf16.mxu0 0
        %369 = vmatpush1.bf16.msra.mxu0 0
        %370 = vmatprep.subr.bf16.mxu0 0
        %371 = vmatpush1.bf16.msra.mxu0 0
        %372 = vmatprep.subr.bf16.mxu0 0
        %373 = vmatpush1.bf16.msra.mxu0 0
        %374 = vmatprep.subr.bf16.mxu0 0
        %375 = vmatpush1.bf16.msra.mxu0 0
        %376 = vmatprep.subr.bf16.mxu0 0
        %377 = vmatpush1.bf16.msra.mxu0 0
        %378 = vmatprep.subr.bf16.mxu0 0
        %379 = vmatpush1.bf16.msra.mxu0 0
        %380 = vmatprep.subr.bf16.mxu0 0
        %381 = vmatpush1.bf16.msra.mxu0 0
        %382 = vmatprep.subr.bf16.mxu0 0
        %383 = vmatpush1.bf16.msra.mxu0 0
        %384 = vmatprep.subr.bf16.mxu0 0
        %385 = vmatpush1.bf16.msra.mxu0 0
        %386 = vmatprep.subr.bf16.mxu0 0
        %387 = vmatpush1.bf16.msra.mxu0 0
        %388 = vmatprep.subr.bf16.mxu0 0
        %389 = vmatpush1.bf16.msra.mxu0 0
        %390 = vmatprep.mubr.bf16.mxu0 0
        %391 = vmatmul.mubr.bf16.gmra.mrb[0].mxu0 %v351
        %v392 = vpop.f32.mrb[0].mxu0
        %v393 = vadd.f32 %v347, %v392
        %v394 = vpop.f32.mrb[0].mxu0
        %v395 = vadd.f32 %v347, %v394
        %v396 = vpop.f32.mrb[0].mxu0
        %v397 = vpop.f32.mrb[0].mxu0
        %398 = vdwg.mxu0
        %v399 = vmax.f32 %v393, 0.0
        %v400 = vmax.f32 %v395, 0.0
        %v401 = vlaneseq
        %v402 = vand.u32 %v401, 127
        %v403 = vadd.s32 %v402, 128
        %s404 = smul.u32 %s26, 128
        %s405 = ssub.s32 %s404, 2
        %v406 = vstv %s405
        %v407 = vadd.s32 %v406, %v402
        %v408 = vadd.s32 %v406, %v403
        %vm409 = vcmp.ge.s32.totalorder %v407, 0
        %vm410 = vcmp.ge.s32.totalorder %v408, 0
        %v411 = vsel %vm409, 1, 0
        %v412 = vsel %vm410, 1, 0
        %vm413 = vcmp.eq.s32.totalorder %v411, 1
        %vm414 = vcmp.eq.s32.totalorder %v412, 1
        %v415 = vsel %vm413, %v399, 0.0
        %v416 = vsel %vm414, %v400, 0.0
        %v417 = vpack.c.bf16 %v415, %v415
        %v418 = vpack.c.bf16 %v416, %v416
        %v421 = vrot.slane %v417, 4
        %v422 = vrot.slane %v418, 4
        %423 = vrot.lane.b32.xlu0 %v421, 127
        %v424 = vpop.permute.xlu0 %423
        %425 = vrot.lane.b32.xlu0 %v422, 127
        %v426 = vpop.permute.xlu0 %425
        %v427 = vsel %vm322, %v424, %v426
        %428 = vrot.lane.b32.xlu0 %v417, 126
        %v429 = vpop.permute.xlu0 %428
        %430 = vrot.lane.b32.xlu0 %v418, 126
        %v431 = vpop.permute.xlu0 %430
        %v432 = vsel %vm330, %v429, %v431
        %v435 = vsel %vm337, %v417, %v427
        %v437 = vld [vmem:[%s3] sm:$0xf]
        %v438 = vld [vmem:[%s4] sm:$0xff]
        %440 = vset.pattern.permute.xlu0 0
        %441 = vperm.xlu0 %440, %v438
        %v442 = vpop.permute.xlu0 %441
        %vm444 = vcmask 195584
        %v446 = vsel %vm444, %v437, 0
        %v449 = vsel %vm337, %v432, 0
        %451 = vmatprep.subr.bf16.mxu0 0
        %452 = vmatpush1.bf16.msra.mxu0 %v435
        %453 = vmatprep.subr.bf16.mxu0 0
        %454 = vmatpush1.bf16.msra.mxu0 %v449
        %455 = vmatprep.subr.bf16.mxu0 0
        %456 = vmatpush1.bf16.msra.mxu0 0
        %457 = vmatprep.subr.bf16.mxu0 0
        %458 = vmatpush1.bf16.msra.mxu0 0
        %459 = vmatprep.subr.bf16.mxu0 0
        %460 = vmatpush1.bf16.msra.mxu0 0
        %461 = vmatprep.subr.bf16.mxu0 0
        %462 = vmatpush1.bf16.msra.mxu0 0
        %463 = vmatprep.subr.bf16.mxu0 0
        %464 = vmatpush1.bf16.msra.mxu0 0
        %465 = vmatprep.subr.bf16.mxu0 0
        %466 = vmatpush1.bf16.msra.mxu0 0
        %467 = vmatprep.subr.bf16.mxu0 0
        %468 = vmatpush1.bf16.msra.mxu0 0
        %469 = vmatprep.subr.bf16.mxu0 0
        %470 = vmatpush1.bf16.msra.mxu0 0
        %471 = vmatprep.subr.bf16.mxu0 0
        %472 = vmatpush1.bf16.msra.mxu0 0
        %473 = vmatprep.subr.bf16.mxu0 0
        %474 = vmatpush1.bf16.msra.mxu0 0
        %475 = vmatprep.subr.bf16.mxu0 0
        %476 = vmatpush1.bf16.msra.mxu0 0
        %477 = vmatprep.subr.bf16.mxu0 0
        %478 = vmatpush1.bf16.msra.mxu0 0
        %479 = vmatprep.subr.bf16.mxu0 0
        %480 = vmatpush1.bf16.msra.mxu0 0
        %481 = vmatprep.subr.bf16.mxu0 0
        %482 = vmatpush1.bf16.msra.mxu0 0
        %483 = vmatprep.mubr.bf16.mxu0 0
        %484 = vmatmul.mubr.bf16.gmra.mrb[0].mxu0 %v446
        %v485 = vpop.f32.mrb[0].mxu0
        %v486 = vadd.f32 %v442, %v485
        %v487 = vpop.f32.mrb[0].mxu0
        %v488 = vpop.f32.mrb[0].mxu0
        %v489 = vpop.f32.mrb[0].mxu0
        %490 = vdwg.mxu0
        %v491 = vmax.f32 %v486, 0.0
        %v492 = vld [vmem:[%s5] sm:$0xf]
        %v493 = vld [vmem:[%s6] sm:$0xff]
        %495 = vset.pattern.permute.xlu0 0
        %496 = vperm.xlu0 %495, %v493
        %v497 = vpop.permute.xlu0 %496
        %v500 = vsel %vm311, %v492, 0
        %v502 = vsel %vm332, %v314, 0
        %504 = vmatprep.subr.bf16.mxu0 0
        %505 = vmatpush1.bf16.msra.mxu0 %v502
        %506 = vmatprep.subr.bf16.mxu0 0
        %507 = vmatpush1.bf16.msra.mxu0 0
        %508 = vmatprep.subr.bf16.mxu0 0
        %509 = vmatpush1.bf16.msra.mxu0 0
        %510 = vmatprep.subr.bf16.mxu0 0
        %511 = vmatpush1.bf16.msra.mxu0 0
        %512 = vmatprep.subr.bf16.mxu0 0
        %513 = vmatpush1.bf16.msra.mxu0 0
        %514 = vmatprep.subr.bf16.mxu0 0
        %515 = vmatpush1.bf16.msra.mxu0 0
        %516 = vmatprep.subr.bf16.mxu0 0
        %517 = vmatpush1.bf16.msra.mxu0 0
        %518 = vmatprep.subr.bf16.mxu0 0
        %519 = vmatpush1.bf16.msra.mxu0 0
        %520 = vmatprep.subr.bf16.mxu0 0
        %521 = vmatpush1.bf16.msra.mxu0 0
        %522 = vmatprep.subr.bf16.mxu0 0
        %523 = vmatpush1.bf16.msra.mxu0 0
        %524 = vmatprep.subr.bf16.mxu0 0
        %525 = vmatpush1.bf16.msra.mxu0 0
        %526 = vmatprep.subr.bf16.mxu0 0
        %527 = vmatpush1.bf16.msra.mxu0 0
        %528 = vmatprep.subr.bf16.mxu0 0
        %529 = vmatpush1.bf16.msra.mxu0 0
        %530 = vmatprep.subr.bf16.mxu0 0
        %531 = vmatpush1.bf16.msra.mxu0 0
        %532 = vmatprep.subr.bf16.mxu0 0
        %533 = vmatpush1.bf16.msra.mxu0 0
        %534 = vmatprep.subr.bf16.mxu0 0
        %535 = vmatpush1.bf16.msra.mxu0 0
        %536 = vmatprep.mubr.bf16.mxu0 0
        %537 = vmatmul.mubr.bf16.gmra.mrb[0].mxu0 %v500
        %v538 = vpop.f32.mrb[0].mxu0
        %v539 = vadd.f32 %v497, %v538
        %v540 = vpop.f32.mrb[0].mxu0
        %v541 = vpop.f32.mrb[0].mxu0
        %v542 = vpop.f32.mrb[0].mxu0
        %543 = vdwg.mxu0
        %v544 = vadd.f32 %v491, %v539
        %v545 = vmax.f32 %v544, 0.0
        %v546 = vpack.c.bf16 %v545, %v545
        %547 = vst [vmem:[%s291] sm:$0xf] %v546
        %s548 = sand.u32 %s197, 1
        %s549 = scalar_lea.sflag [#allocation3], %s548
        %s550 = sand.u32 %s197, 1
        %s551 = smul.addr %s550, 4
        %s552 = scalar_lea.vmem [#allocation2], %s551
        // Predicated region
        $region49: #{tpu_custom_call.1} parent=47 // pred_check
          %p553 = pneg %p207
        $region50: #{tpu_custom_call.1} parent=47 // pred_check_branch
          %555 = sbr.rel (%p553) target = $region52
        $region51: #{tpu_custom_call.1} parent=47 // pred_region
          %s557 = ssub.s32 64, 64
          %558 = vsyncadd %s549, %s557
          %s559 = sadd.s32 %s26, %s25
          %s560 = smul.addr %s559, 64
          %s561 = scalar_lea.hbm %s7, %s560
          %s563 = sshll.u32 %s552, 4
          %s564 = int_to_ptr.vmem [resolvable:$true] %s563
          %566 = dma.vmem_to_hbm [thread:$0]  %s564, 64, %s561, %s549
        $region52: #{tpu_custom_call.1} parent=47 // pred_fallthru
          _
      $region48: #{tpu_custom_call.1} parent=5 // pred_fallthru
        _
      %p567 = scmp.le.s32.totalorder 2, %s16
      // Predicated region
      $region53: #{tpu_custom_call.1} parent=5 // pred_check
        %p568 = pneg %p567
      $region54: #{tpu_custom_call.1} parent=5 // pred_check_branch
        %570 = sbr.rel (%p568) target = $region56
      $region55: #{tpu_custom_call.1} parent=5 // pred_region
        %s571 = ssub.s32 %s16, 2
        // Predicated region
        $region57: #{tpu_custom_call.1} parent=55 // pred_check
          %p572 = pneg %p213
        $region58: #{tpu_custom_call.1} parent=55 // pred_check_branch
          %574 = sbr.rel (%p572) target = $region60
        $region59: #{tpu_custom_call.1} parent=55 // pred_region
          %s575 = sand.u32 %s198, 1
          %s576 = scalar_lea.sflag [#allocation3], %s575
          %s577 = sand.u32 %s198, 1
          %s578 = smul.addr %s577, 4
          %s579 = scalar_lea.vmem [#allocation2], %s578
          %580 = dma.done %s576, 64
        $region60: #{tpu_custom_call.1} parent=55 // pred_fallthru
          _
      $region56: #{tpu_custom_call.1} parent=5 // pred_fallthru
        _
    $region6: #{tpu_custom_call.1} parent=1 // loop_footer
      %s20 = sadd.s32 1, %s16
    $region7: #{tpu_custom_call.1} parent=1 // loop_footer_branch
      %15 = sbr.rel target = $region3
    $region8: #{tpu_custom_call.1} parent=1 // loop_exit
      _
    %581 = vsyncpa [#allocation3], 1
    %s582 = scalar_lea.sflag [#allocation3], 1
    %583 = vsyncpa %s582, 1

</llo_original>
